<compile_context>
chip_gen: v7x
topology: tpu7x:2x2x1
jax: 0.10.0
libtpu: 0.0.40
codegen_flags: <defaults>
</compile_context>

<pallas_src>
import jax
import jax.numpy as jnp
from jax import lax
from jax.experimental import pallas as pl
from jax.experimental.pallas import tpu as pltpu

LANE = 128          # vreg lane width
SUB = 8             # f32 vreg sublane count
CHUNK = 4 * SUB     # rows per inner-loop iteration: 4 independent vregs (ILP)

N_IN, N_H1, N_H2, N_OUT = 1, 10, 5, 1
# offsets into the packed flat parameter vector
W1_OFF = 0
B1_OFF = W1_OFF + N_H1           # 10
W2_OFF = B1_OFF + N_H1           # 20   (stored [out g, in f], row-major, 5*10)
B2_OFF = W2_OFF + N_H2 * N_H1    # 70
W3_OFF = B2_OFF + N_H2           # 75
B3_OFF = W3_OFF + N_H2           # 80
N_PARAMS = B3_OFF + 1            # 81


def mlp_kernel(p_ref, x_ref, o_ref):
    # p_ref: (81,) f32 in SMEM.  x_ref / o_ref: (block_rows, 128) f32 in VMEM.
    # Hoist all 81 parameter scalar reads out of the loop (scalar operands broadcast
    # for free into VPU ops — do NOT pre-splat them into vregs).
    w1 = [p_ref[W1_OFF + f] for f in range(N_H1)]
    b1 = [p_ref[B1_OFF + f] for f in range(N_H1)]
    w2 = [[p_ref[W2_OFF + g * N_H1 + f] for f in range(N_H1)] for g in range(N_H2)]
    b2 = [p_ref[B2_OFF + g] for g in range(N_H2)]
    w3 = [p_ref[W3_OFF + g] for g in range(N_H2)]
    b3 = p_ref[B3_OFF]

    nchunks = x_ref.shape[0] // CHUNK

    def chunk(c, carry):
        r = pl.multiple_of(c * CHUNK, CHUNK)
        x = x_ref[pl.ds(r, CHUNK), :]                     # (32, 128): 4 vregs in flight
        # layer1 (in=1) is an outer product; feature 0 seeds the 5 layer-2 accumulators
        h1 = jnp.maximum(w1[0] * x + b1[0], 0.0)
        acc = [w2[g][0] * h1 + b2[g] for g in range(N_H2)]
        # remaining layer-1 features, fused directly into the layer-2 accumulation
        for f in range(1, N_H1):
            h1 = jnp.maximum(w1[f] * x + b1[f], 0.0)
            for g in range(N_H2):
                acc[g] = acc[g] + w2[g][f] * h1
        # layer-2 ReLU + output layer (5 -> 1)
        y = w3[0] * jnp.maximum(acc[0], 0.0) + b3
        for g in range(1, N_H2):
            y = y + w3[g] * jnp.maximum(acc[g], 0.0)
        o_ref[pl.ds(r, CHUNK), :] = y
        return carry

    # ~32-40 live vregs per 4-wide chunk: register-resident, no spills.  Fully unroll
    # only short trip counts; the 4-vreg chunk already supplies the ILP for long ones
    # (unrolling further would go 8-wide and spill).
    lax.fori_loop(0, nchunks, chunk, 0, unroll=(nchunks <= 4))


def pack_params(p):
    """Flatten w1,b1,w2,b2,w3,b3 into one (81,) f32 vector (w2 stored [out, in])."""
    return jnp.concatenate([
        p["w1"].reshape(-1),        # (1,10)  -> 10, index f
        p["b1"].reshape(-1),        # (1,10)  -> 10
        p["w2"].T.reshape(-1),      # (10,5)  -> (5,10) row-major -> 50, index g*10+f
        p["b2"].reshape(-1),        # (1,5)   -> 5
        p["w3"].reshape(-1),        # (5,1)   -> 5
        p["b3"].reshape(-1),        # (1,1)   -> 1
    ]).astype(jnp.float32)


def _round_up(a, m):
    return -(-a // m) * m


def complex_model_forward(x, params, *, block_rows=2048):
    """x: (N, 1) float32.  params: dict of w1,b1,w2,b2,w3,b3 (w: (in,out), b: (1,out))."""
    n = x.shape[0]
    assert x.ndim == 2 and x.shape[1] == N_IN

    # Lane-dense slab dimensions: rows is a multiple of CHUNK so the in-kernel loop is exact.
    rows = _round_up(max(-(-n // LANE), 1), CHUNK)
    br = _round_up(max(CHUNK, min(block_rows, rows)), CHUNK)
    # v7x megacore: for sizeable workloads force >= 2 "parallel" grid steps so both
    # TensorCores get work.  Harmless (one extra ~0.35 us step) on v5e/v6e.
    if rows // br < 2 and rows >= 8 * CHUNK:
        br = _round_up(-(-rows // 2), CHUNK)
    rows = _round_up(rows, br)                 # grid divides evenly
    n_pad = rows * LANE

    if n_pad == n:
        # Aligned batch: reshape is free layout-wise, no extra HBM pad pass.
        x_slab = x.astype(jnp.float32).reshape(rows, LANE)
    else:
        x_slab = jnp.pad(x.reshape(-1).astype(jnp.float32),
                         (0, n_pad - n)).reshape(rows, LANE)
    p_flat = pack_params(params)

    out_slab = pl.pallas_call(
        mlp_kernel,
        out_shape=jax.ShapeDtypeStruct((rows, LANE), jnp.float32),
        grid_spec=pltpu.PrefetchScalarGridSpec(
            num_scalar_prefetch=0,
            grid=(rows // br,),
            in_specs=[
                pl.BlockSpec(memory_space=pltpu.MemorySpace.SMEM),  # packed params
                pl.BlockSpec((br, LANE), lambda i: (i, 0)),         # x tile (lane-dense)
            ],
            out_specs=pl.BlockSpec((br, LANE), lambda i: (i, 0)),
        ),
        compiler_params=pltpu.CompilerParams(
            dimension_semantics=("parallel",),
        ),
    )(p_flat, x_slab)

    if n_pad == n:
        return out_slab.reshape(n, N_OUT)
    return out_slab.reshape(-1)[:n].reshape(n, N_OUT)


def init_params(key):
    """Deterministic init mimicking nn.Linear default (uniform +-1/sqrt(fan_in))."""
    def linear(key, fan_in, fan_out):
        kw, kb = jax.random.split(key)
        bound = 1.0 / jnp.sqrt(fan_in)
        w = jax.random.uniform(kw, (fan_in, fan_out), jnp.float32, -bound, bound)
        b = jax.random.uniform(kb, (1, fan_out), jnp.float32, -bound, bound)
        return w, b

    k1, k2, k3 = jax.random.split(key, 3)
    w1, b1 = linear(k1, 1, 10)
    w2, b2 = linear(k2, 10, 5)
    w3, b3 = linear(k3, 5, 1)
    return {"w1": w1, "b1": b1, "w2": w2, "b2": b2, "w3": w3, "b3": b3}


def reference_forward(x, p):
    h1 = jnp.maximum(x @ p["w1"] + p["b1"], 0.0)
    h2 = jnp.maximum(h1 @ p["w2"] + p["b2"], 0.0)
    return h2 @ p["w3"] + p["b3"]


if __name__ == "__main__":
    key = jax.random.PRNGKey(0)
    kx, kx2, kp = jax.random.split(key, 3)
    params = init_params(kp)

    # Small demo batch (padded / single-grid-step path).
    batch = 16
    x = jax.random.normal(kx, (batch, 1), jnp.float32)
    out = jax.block_until_ready(complex_model_forward(x, params))
    ref = reference_forward(x, params)
    assert out.shape == (batch, 1)
    assert jnp.allclose(out, ref, atol=1e-5, rtol=1e-5), "mismatch vs reference (small)"

    # Slab-aligned batch (no-pad fast path, multi-chunk inner loop).
    batch2 = 4096
    x2 = jax.random.normal(kx2, (batch2, 1), jnp.float32)
    out2 = jax.block_until_ready(complex_model_forward(x2, params))
    ref2 = reference_forward(x2, params)
    assert out2.shape == (batch2, 1)
    assert jnp.allclose(out2, ref2, atol=1e-5, rtol=1e-5), "mismatch vs reference (aligned)"

    print("KERNEL_OK")
</pallas_src>

<mosaic_0001>
module attributes {stable_mosaic.version = 11 : i64} {
  func.func @mlp_kernel(%arg0: i32, %arg1: memref<81xf32, #tpu.memory_space<smem>>, %arg2: memref<32x128xf32, #tpu.memory_space<vmem>>, %arg3: memref<32x128xf32, #tpu.memory_space<vmem>>) attributes {dimension_semantics = [#tpu.dimension_semantics<parallel>], iteration_bounds = array<i64: 1>, scalar_prefetch = 0 : i64, scratch_operands = 0 : i64, tpu.core_type = #tpu.core_type<tc>, window_params = [{transform_indices = @transform_0, window_bounds = array<i64: 81>}, {transform_indices = @transform_1, window_bounds = array<i64: 32, 128>}, {transform_indices = @transform_2, window_bounds = array<i64: 32, 128>}]} {
    %c0 = arith.constant 0 : index
    %0 = memref.load %arg1[%c0] : memref<81xf32, #tpu.memory_space<smem>>
    %c1 = arith.constant 1 : index
    %1 = memref.load %arg1[%c1] : memref<81xf32, #tpu.memory_space<smem>>
    %c2 = arith.constant 2 : index
    %2 = memref.load %arg1[%c2] : memref<81xf32, #tpu.memory_space<smem>>
    %c3 = arith.constant 3 : index
    %3 = memref.load %arg1[%c3] : memref<81xf32, #tpu.memory_space<smem>>
    %c4 = arith.constant 4 : index
    %4 = memref.load %arg1[%c4] : memref<81xf32, #tpu.memory_space<smem>>
    %c5 = arith.constant 5 : index
    %5 = memref.load %arg1[%c5] : memref<81xf32, #tpu.memory_space<smem>>
    %c6 = arith.constant 6 : index
    %6 = memref.load %arg1[%c6] : memref<81xf32, #tpu.memory_space<smem>>
    %c7 = arith.constant 7 : index
    %7 = memref.load %arg1[%c7] : memref<81xf32, #tpu.memory_space<smem>>
    %c8 = arith.constant 8 : index
    %8 = memref.load %arg1[%c8] : memref<81xf32, #tpu.memory_space<smem>>
    %c9 = arith.constant 9 : index
    %9 = memref.load %arg1[%c9] : memref<81xf32, #tpu.memory_space<smem>>
    %c10 = arith.constant 10 : index
    %10 = memref.load %arg1[%c10] : memref<81xf32, #tpu.memory_space<smem>>
    %c11 = arith.constant 11 : index
    %11 = memref.load %arg1[%c11] : memref<81xf32, #tpu.memory_space<smem>>
    %c12 = arith.constant 12 : index
    %12 = memref.load %arg1[%c12] : memref<81xf32, #tpu.memory_space<smem>>
    %c13 = arith.constant 13 : index
    %13 = memref.load %arg1[%c13] : memref<81xf32, #tpu.memory_space<smem>>
    %c14 = arith.constant 14 : index
    %14 = memref.load %arg1[%c14] : memref<81xf32, #tpu.memory_space<smem>>
    %c15 = arith.constant 15 : index
    %15 = memref.load %arg1[%c15] : memref<81xf32, #tpu.memory_space<smem>>
    %c16 = arith.constant 16 : index
    %16 = memref.load %arg1[%c16] : memref<81xf32, #tpu.memory_space<smem>>
    %c17 = arith.constant 17 : index
    %17 = memref.load %arg1[%c17] : memref<81xf32, #tpu.memory_space<smem>>
    %c18 = arith.constant 18 : index
    %18 = memref.load %arg1[%c18] : memref<81xf32, #tpu.memory_space<smem>>
    %c19 = arith.constant 19 : index
    %19 = memref.load %arg1[%c19] : memref<81xf32, #tpu.memory_space<smem>>
    %c20 = arith.constant 20 : index
    %20 = memref.load %arg1[%c20] : memref<81xf32, #tpu.memory_space<smem>>
    %c21 = arith.constant 21 : index
    %21 = memref.load %arg1[%c21] : memref<81xf32, #tpu.memory_space<smem>>
    %c22 = arith.constant 22 : index
    %22 = memref.load %arg1[%c22] : memref<81xf32, #tpu.memory_space<smem>>
    %c23 = arith.constant 23 : index
    %23 = memref.load %arg1[%c23] : memref<81xf32, #tpu.memory_space<smem>>
    %c24 = arith.constant 24 : index
    %24 = memref.load %arg1[%c24] : memref<81xf32, #tpu.memory_space<smem>>
    %c25 = arith.constant 25 : index
    %25 = memref.load %arg1[%c25] : memref<81xf32, #tpu.memory_space<smem>>
    %c26 = arith.constant 26 : index
    %26 = memref.load %arg1[%c26] : memref<81xf32, #tpu.memory_space<smem>>
    %c27 = arith.constant 27 : index
    %27 = memref.load %arg1[%c27] : memref<81xf32, #tpu.memory_space<smem>>
    %c28 = arith.constant 28 : index
    %28 = memref.load %arg1[%c28] : memref<81xf32, #tpu.memory_space<smem>>
    %c29 = arith.constant 29 : index
    %29 = memref.load %arg1[%c29] : memref<81xf32, #tpu.memory_space<smem>>
    %c30 = arith.constant 30 : index
    %30 = memref.load %arg1[%c30] : memref<81xf32, #tpu.memory_space<smem>>
    %c31 = arith.constant 31 : index
    %31 = memref.load %arg1[%c31] : memref<81xf32, #tpu.memory_space<smem>>
    %c32 = arith.constant 32 : index
    %32 = memref.load %arg1[%c32] : memref<81xf32, #tpu.memory_space<smem>>
    %c33 = arith.constant 33 : index
    %33 = memref.load %arg1[%c33] : memref<81xf32, #tpu.memory_space<smem>>
    %c34 = arith.constant 34 : index
    %34 = memref.load %arg1[%c34] : memref<81xf32, #tpu.memory_space<smem>>
    %c35 = arith.constant 35 : index
    %35 = memref.load %arg1[%c35] : memref<81xf32, #tpu.memory_space<smem>>
    %c36 = arith.constant 36 : index
    %36 = memref.load %arg1[%c36] : memref<81xf32, #tpu.memory_space<smem>>
    %c37 = arith.constant 37 : index
    %37 = memref.load %arg1[%c37] : memref<81xf32, #tpu.memory_space<smem>>
    %c38 = arith.constant 38 : index
    %38 = memref.load %arg1[%c38] : memref<81xf32, #tpu.memory_space<smem>>
    %c39 = arith.constant 39 : index
    %39 = memref.load %arg1[%c39] : memref<81xf32, #tpu.memory_space<smem>>
    %c40 = arith.constant 40 : index
    %40 = memref.load %arg1[%c40] : memref<81xf32, #tpu.memory_space<smem>>
    %c41 = arith.constant 41 : index
    %41 = memref.load %arg1[%c41] : memref<81xf32, #tpu.memory_space<smem>>
    %c42 = arith.constant 42 : index
    %42 = memref.load %arg1[%c42] : memref<81xf32, #tpu.memory_space<smem>>
    %c43 = arith.constant 43 : index
    %43 = memref.load %arg1[%c43] : memref<81xf32, #tpu.memory_space<smem>>
    %c44 = arith.constant 44 : index
    %44 = memref.load %arg1[%c44] : memref<81xf32, #tpu.memory_space<smem>>
    %c45 = arith.constant 45 : index
    %45 = memref.load %arg1[%c45] : memref<81xf32, #tpu.memory_space<smem>>
    %c46 = arith.constant 46 : index
    %46 = memref.load %arg1[%c46] : memref<81xf32, #tpu.memory_space<smem>>
    %c47 = arith.constant 47 : index
    %47 = memref.load %arg1[%c47] : memref<81xf32, #tpu.memory_space<smem>>
    %c48 = arith.constant 48 : index
    %48 = memref.load %arg1[%c48] : memref<81xf32, #tpu.memory_space<smem>>
    %c49 = arith.constant 49 : index
    %49 = memref.load %arg1[%c49] : memref<81xf32, #tpu.memory_space<smem>>
    %c50 = arith.constant 50 : index
    %50 = memref.load %arg1[%c50] : memref<81xf32, #tpu.memory_space<smem>>
    %c51 = arith.constant 51 : index
    %51 = memref.load %arg1[%c51] : memref<81xf32, #tpu.memory_space<smem>>
    %c52 = arith.constant 52 : index
    %52 = memref.load %arg1[%c52] : memref<81xf32, #tpu.memory_space<smem>>
    %c53 = arith.constant 53 : index
    %53 = memref.load %arg1[%c53] : memref<81xf32, #tpu.memory_space<smem>>
    %c54 = arith.constant 54 : index
    %54 = memref.load %arg1[%c54] : memref<81xf32, #tpu.memory_space<smem>>
    %c55 = arith.constant 55 : index
    %55 = memref.load %arg1[%c55] : memref<81xf32, #tpu.memory_space<smem>>
    %c56 = arith.constant 56 : index
    %56 = memref.load %arg1[%c56] : memref<81xf32, #tpu.memory_space<smem>>
    %c57 = arith.constant 57 : index
    %57 = memref.load %arg1[%c57] : memref<81xf32, #tpu.memory_space<smem>>
    %c58 = arith.constant 58 : index
    %58 = memref.load %arg1[%c58] : memref<81xf32, #tpu.memory_space<smem>>
    %c59 = arith.constant 59 : index
    %59 = memref.load %arg1[%c59] : memref<81xf32, #tpu.memory_space<smem>>
    %c60 = arith.constant 60 : index
    %60 = memref.load %arg1[%c60] : memref<81xf32, #tpu.memory_space<smem>>
    %c61 = arith.constant 61 : index
    %61 = memref.load %arg1[%c61] : memref<81xf32, #tpu.memory_space<smem>>
    %c62 = arith.constant 62 : index
    %62 = memref.load %arg1[%c62] : memref<81xf32, #tpu.memory_space<smem>>
    %c63 = arith.constant 63 : index
    %63 = memref.load %arg1[%c63] : memref<81xf32, #tpu.memory_space<smem>>
    %c64 = arith.constant 64 : index
    %64 = memref.load %arg1[%c64] : memref<81xf32, #tpu.memory_space<smem>>
    %c65 = arith.constant 65 : index
    %65 = memref.load %arg1[%c65] : memref<81xf32, #tpu.memory_space<smem>>
    %c66 = arith.constant 66 : index
    %66 = memref.load %arg1[%c66] : memref<81xf32, #tpu.memory_space<smem>>
    %c67 = arith.constant 67 : index
    %67 = memref.load %arg1[%c67] : memref<81xf32, #tpu.memory_space<smem>>
    %c68 = arith.constant 68 : index
    %68 = memref.load %arg1[%c68] : memref<81xf32, #tpu.memory_space<smem>>
    %c69 = arith.constant 69 : index
    %69 = memref.load %arg1[%c69] : memref<81xf32, #tpu.memory_space<smem>>
    %c70 = arith.constant 70 : index
    %70 = memref.load %arg1[%c70] : memref<81xf32, #tpu.memory_space<smem>>
    %c71 = arith.constant 71 : index
    %71 = memref.load %arg1[%c71] : memref<81xf32, #tpu.memory_space<smem>>
    %c72 = arith.constant 72 : index
    %72 = memref.load %arg1[%c72] : memref<81xf32, #tpu.memory_space<smem>>
    %c73 = arith.constant 73 : index
    %73 = memref.load %arg1[%c73] : memref<81xf32, #tpu.memory_space<smem>>
    %c74 = arith.constant 74 : index
    %74 = memref.load %arg1[%c74] : memref<81xf32, #tpu.memory_space<smem>>
    %c75 = arith.constant 75 : index
    %75 = memref.load %arg1[%c75] : memref<81xf32, #tpu.memory_space<smem>>
    %c76 = arith.constant 76 : index
    %76 = memref.load %arg1[%c76] : memref<81xf32, #tpu.memory_space<smem>>
    %c77 = arith.constant 77 : index
    %77 = memref.load %arg1[%c77] : memref<81xf32, #tpu.memory_space<smem>>
    %c78 = arith.constant 78 : index
    %78 = memref.load %arg1[%c78] : memref<81xf32, #tpu.memory_space<smem>>
    %c79 = arith.constant 79 : index
    %79 = memref.load %arg1[%c79] : memref<81xf32, #tpu.memory_space<smem>>
    %c80 = arith.constant 80 : index
    %80 = memref.load %arg1[%c80] : memref<81xf32, #tpu.memory_space<smem>>
    %c0_i32 = arith.constant 0 : i32
    %c32_i32 = arith.constant 32 : i32
    %81 = arith.muli %c0_i32, %c32_i32 : i32
    %82 = tpu.assume_multiple %81, 32 : i32
    %83 = arith.index_cast %82 : i32 to index
    %c0_0 = arith.constant 0 : index
    %84 = vector.load %arg2[%83, %c0_0] : memref<32x128xf32, #tpu.memory_space<vmem>>, vector<32x128xf32>
    %85 = vector.broadcast %0 : f32 to vector<32x128xf32>
    %86 = arith.mulf %85, %84 : vector<32x128xf32>
    %87 = vector.broadcast %10 : f32 to vector<32x128xf32>
    %88 = arith.addf %86, %87 : vector<32x128xf32>
    %cst = arith.constant 0.000000e+00 : f32
    %89 = vector.broadcast %cst : f32 to vector<32x128xf32>
    %90 = arith.maximumf %88, %89 : vector<32x128xf32>
    %91 = vector.broadcast %20 : f32 to vector<32x128xf32>
    %92 = arith.mulf %91, %90 : vector<32x128xf32>
    %93 = vector.broadcast %70 : f32 to vector<32x128xf32>
    %94 = arith.addf %92, %93 : vector<32x128xf32>
    %95 = vector.broadcast %30 : f32 to vector<32x128xf32>
    %96 = arith.mulf %95, %90 : vector<32x128xf32>
    %97 = vector.broadcast %71 : f32 to vector<32x128xf32>
    %98 = arith.addf %96, %97 : vector<32x128xf32>
    %99 = vector.broadcast %40 : f32 to vector<32x128xf32>
    %100 = arith.mulf %99, %90 : vector<32x128xf32>
    %101 = vector.broadcast %72 : f32 to vector<32x128xf32>
    %102 = arith.addf %100, %101 : vector<32x128xf32>
    %103 = vector.broadcast %50 : f32 to vector<32x128xf32>
    %104 = arith.mulf %103, %90 : vector<32x128xf32>
    %105 = vector.broadcast %73 : f32 to vector<32x128xf32>
    %106 = arith.addf %104, %105 : vector<32x128xf32>
    %107 = vector.broadcast %60 : f32 to vector<32x128xf32>
    %108 = arith.mulf %107, %90 : vector<32x128xf32>
    %109 = vector.broadcast %74 : f32 to vector<32x128xf32>
    %110 = arith.addf %108, %109 : vector<32x128xf32>
    %111 = vector.broadcast %1 : f32 to vector<32x128xf32>
    %112 = arith.mulf %111, %84 : vector<32x128xf32>
    %113 = vector.broadcast %11 : f32 to vector<32x128xf32>
    %114 = arith.addf %112, %113 : vector<32x128xf32>
    %cst_1 = arith.constant 0.000000e+00 : f32
    %115 = vector.broadcast %cst_1 : f32 to vector<32x128xf32>
    %116 = arith.maximumf %114, %115 : vector<32x128xf32>
    %117 = vector.broadcast %21 : f32 to vector<32x128xf32>
    %118 = arith.mulf %117, %116 : vector<32x128xf32>
    %119 = arith.addf %94, %118 : vector<32x128xf32>
    %120 = vector.broadcast %31 : f32 to vector<32x128xf32>
    %121 = arith.mulf %120, %116 : vector<32x128xf32>
    %122 = arith.addf %98, %121 : vector<32x128xf32>
    %123 = vector.broadcast %41 : f32 to vector<32x128xf32>
    %124 = arith.mulf %123, %116 : vector<32x128xf32>
    %125 = arith.addf %102, %124 : vector<32x128xf32>
    %126 = vector.broadcast %51 : f32 to vector<32x128xf32>
    %127 = arith.mulf %126, %116 : vector<32x128xf32>
    %128 = arith.addf %106, %127 : vector<32x128xf32>
    %129 = vector.broadcast %61 : f32 to vector<32x128xf32>
    %130 = arith.mulf %129, %116 : vector<32x128xf32>
    %131 = arith.addf %110, %130 : vector<32x128xf32>
    %132 = vector.broadcast %2 : f32 to vector<32x128xf32>
    %133 = arith.mulf %132, %84 : vector<32x128xf32>
    %134 = vector.broadcast %12 : f32 to vector<32x128xf32>
    %135 = arith.addf %133, %134 : vector<32x128xf32>
    %cst_2 = arith.constant 0.000000e+00 : f32
    %136 = vector.broadcast %cst_2 : f32 to vector<32x128xf32>
    %137 = arith.maximumf %135, %136 : vector<32x128xf32>
    %138 = vector.broadcast %22 : f32 to vector<32x128xf32>
    %139 = arith.mulf %138, %137 : vector<32x128xf32>
    %140 = arith.addf %119, %139 : vector<32x128xf32>
    %141 = vector.broadcast %32 : f32 to vector<32x128xf32>
    %142 = arith.mulf %141, %137 : vector<32x128xf32>
    %143 = arith.addf %122, %142 : vector<32x128xf32>
    %144 = vector.broadcast %42 : f32 to vector<32x128xf32>
    %145 = arith.mulf %144, %137 : vector<32x128xf32>
    %146 = arith.addf %125, %145 : vector<32x128xf32>
    %147 = vector.broadcast %52 : f32 to vector<32x128xf32>
    %148 = arith.mulf %147, %137 : vector<32x128xf32>
    %149 = arith.addf %128, %148 : vector<32x128xf32>
    %150 = vector.broadcast %62 : f32 to vector<32x128xf32>
    %151 = arith.mulf %150, %137 : vector<32x128xf32>
    %152 = arith.addf %131, %151 : vector<32x128xf32>
    %153 = vector.broadcast %3 : f32 to vector<32x128xf32>
    %154 = arith.mulf %153, %84 : vector<32x128xf32>
    %155 = vector.broadcast %13 : f32 to vector<32x128xf32>
    %156 = arith.addf %154, %155 : vector<32x128xf32>
    %cst_3 = arith.constant 0.000000e+00 : f32
    %157 = vector.broadcast %cst_3 : f32 to vector<32x128xf32>
    %158 = arith.maximumf %156, %157 : vector<32x128xf32>
    %159 = vector.broadcast %23 : f32 to vector<32x128xf32>
    %160 = arith.mulf %159, %158 : vector<32x128xf32>
    %161 = arith.addf %140, %160 : vector<32x128xf32>
    %162 = vector.broadcast %33 : f32 to vector<32x128xf32>
    %163 = arith.mulf %162, %158 : vector<32x128xf32>
    %164 = arith.addf %143, %163 : vector<32x128xf32>
    %165 = vector.broadcast %43 : f32 to vector<32x128xf32>
    %166 = arith.mulf %165, %158 : vector<32x128xf32>
    %167 = arith.addf %146, %166 : vector<32x128xf32>
    %168 = vector.broadcast %53 : f32 to vector<32x128xf32>
    %169 = arith.mulf %168, %158 : vector<32x128xf32>
    %170 = arith.addf %149, %169 : vector<32x128xf32>
    %171 = vector.broadcast %63 : f32 to vector<32x128xf32>
    %172 = arith.mulf %171, %158 : vector<32x128xf32>
    %173 = arith.addf %152, %172 : vector<32x128xf32>
    %174 = vector.broadcast %4 : f32 to vector<32x128xf32>
    %175 = arith.mulf %174, %84 : vector<32x128xf32>
    %176 = vector.broadcast %14 : f32 to vector<32x128xf32>
    %177 = arith.addf %175, %176 : vector<32x128xf32>
    %cst_4 = arith.constant 0.000000e+00 : f32
    %178 = vector.broadcast %cst_4 : f32 to vector<32x128xf32>
    %179 = arith.maximumf %177, %178 : vector<32x128xf32>
    %180 = vector.broadcast %24 : f32 to vector<32x128xf32>
    %181 = arith.mulf %180, %179 : vector<32x128xf32>
    %182 = arith.addf %161, %181 : vector<32x128xf32>
    %183 = vector.broadcast %34 : f32 to vector<32x128xf32>
    %184 = arith.mulf %183, %179 : vector<32x128xf32>
    %185 = arith.addf %164, %184 : vector<32x128xf32>
    %186 = vector.broadcast %44 : f32 to vector<32x128xf32>
    %187 = arith.mulf %186, %179 : vector<32x128xf32>
    %188 = arith.addf %167, %187 : vector<32x128xf32>
    %189 = vector.broadcast %54 : f32 to vector<32x128xf32>
    %190 = arith.mulf %189, %179 : vector<32x128xf32>
    %191 = arith.addf %170, %190 : vector<32x128xf32>
    %192 = vector.broadcast %64 : f32 to vector<32x128xf32>
    %193 = arith.mulf %192, %179 : vector<32x128xf32>
    %194 = arith.addf %173, %193 : vector<32x128xf32>
    %195 = vector.broadcast %5 : f32 to vector<32x128xf32>
    %196 = arith.mulf %195, %84 : vector<32x128xf32>
    %197 = vector.broadcast %15 : f32 to vector<32x128xf32>
    %198 = arith.addf %196, %197 : vector<32x128xf32>
    %cst_5 = arith.constant 0.000000e+00 : f32
    %199 = vector.broadcast %cst_5 : f32 to vector<32x128xf32>
    %200 = arith.maximumf %198, %199 : vector<32x128xf32>
    %201 = vector.broadcast %25 : f32 to vector<32x128xf32>
    %202 = arith.mulf %201, %200 : vector<32x128xf32>
    %203 = arith.addf %182, %202 : vector<32x128xf32>
    %204 = vector.broadcast %35 : f32 to vector<32x128xf32>
    %205 = arith.mulf %204, %200 : vector<32x128xf32>
    %206 = arith.addf %185, %205 : vector<32x128xf32>
    %207 = vector.broadcast %45 : f32 to vector<32x128xf32>
    %208 = arith.mulf %207, %200 : vector<32x128xf32>
    %209 = arith.addf %188, %208 : vector<32x128xf32>
    %210 = vector.broadcast %55 : f32 to vector<32x128xf32>
    %211 = arith.mulf %210, %200 : vector<32x128xf32>
    %212 = arith.addf %191, %211 : vector<32x128xf32>
    %213 = vector.broadcast %65 : f32 to vector<32x128xf32>
    %214 = arith.mulf %213, %200 : vector<32x128xf32>
    %215 = arith.addf %194, %214 : vector<32x128xf32>
    %216 = vector.broadcast %6 : f32 to vector<32x128xf32>
    %217 = arith.mulf %216, %84 : vector<32x128xf32>
    %218 = vector.broadcast %16 : f32 to vector<32x128xf32>
    %219 = arith.addf %217, %218 : vector<32x128xf32>
    %cst_6 = arith.constant 0.000000e+00 : f32
    %220 = vector.broadcast %cst_6 : f32 to vector<32x128xf32>
    %221 = arith.maximumf %219, %220 : vector<32x128xf32>
    %222 = vector.broadcast %26 : f32 to vector<32x128xf32>
    %223 = arith.mulf %222, %221 : vector<32x128xf32>
    %224 = arith.addf %203, %223 : vector<32x128xf32>
    %225 = vector.broadcast %36 : f32 to vector<32x128xf32>
    %226 = arith.mulf %225, %221 : vector<32x128xf32>
    %227 = arith.addf %206, %226 : vector<32x128xf32>
    %228 = vector.broadcast %46 : f32 to vector<32x128xf32>
    %229 = arith.mulf %228, %221 : vector<32x128xf32>
    %230 = arith.addf %209, %229 : vector<32x128xf32>
    %231 = vector.broadcast %56 : f32 to vector<32x128xf32>
    %232 = arith.mulf %231, %221 : vector<32x128xf32>
    %233 = arith.addf %212, %232 : vector<32x128xf32>
    %234 = vector.broadcast %66 : f32 to vector<32x128xf32>
    %235 = arith.mulf %234, %221 : vector<32x128xf32>
    %236 = arith.addf %215, %235 : vector<32x128xf32>
    %237 = vector.broadcast %7 : f32 to vector<32x128xf32>
    %238 = arith.mulf %237, %84 : vector<32x128xf32>
    %239 = vector.broadcast %17 : f32 to vector<32x128xf32>
    %240 = arith.addf %238, %239 : vector<32x128xf32>
    %cst_7 = arith.constant 0.000000e+00 : f32
    %241 = vector.broadcast %cst_7 : f32 to vector<32x128xf32>
    %242 = arith.maximumf %240, %241 : vector<32x128xf32>
    %243 = vector.broadcast %27 : f32 to vector<32x128xf32>
    %244 = arith.mulf %243, %242 : vector<32x128xf32>
    %245 = arith.addf %224, %244 : vector<32x128xf32>
    %246 = vector.broadcast %37 : f32 to vector<32x128xf32>
    %247 = arith.mulf %246, %242 : vector<32x128xf32>
    %248 = arith.addf %227, %247 : vector<32x128xf32>
    %249 = vector.broadcast %47 : f32 to vector<32x128xf32>
    %250 = arith.mulf %249, %242 : vector<32x128xf32>
    %251 = arith.addf %230, %250 : vector<32x128xf32>
    %252 = vector.broadcast %57 : f32 to vector<32x128xf32>
    %253 = arith.mulf %252, %242 : vector<32x128xf32>
    %254 = arith.addf %233, %253 : vector<32x128xf32>
    %255 = vector.broadcast %67 : f32 to vector<32x128xf32>
    %256 = arith.mulf %255, %242 : vector<32x128xf32>
    %257 = arith.addf %236, %256 : vector<32x128xf32>
    %258 = vector.broadcast %8 : f32 to vector<32x128xf32>
    %259 = arith.mulf %258, %84 : vector<32x128xf32>
    %260 = vector.broadcast %18 : f32 to vector<32x128xf32>
    %261 = arith.addf %259, %260 : vector<32x128xf32>
    %cst_8 = arith.constant 0.000000e+00 : f32
    %262 = vector.broadcast %cst_8 : f32 to vector<32x128xf32>
    %263 = arith.maximumf %261, %262 : vector<32x128xf32>
    %264 = vector.broadcast %28 : f32 to vector<32x128xf32>
    %265 = arith.mulf %264, %263 : vector<32x128xf32>
    %266 = arith.addf %245, %265 : vector<32x128xf32>
    %267 = vector.broadcast %38 : f32 to vector<32x128xf32>
    %268 = arith.mulf %267, %263 : vector<32x128xf32>
    %269 = arith.addf %248, %268 : vector<32x128xf32>
    %270 = vector.broadcast %48 : f32 to vector<32x128xf32>
    %271 = arith.mulf %270, %263 : vector<32x128xf32>
    %272 = arith.addf %251, %271 : vector<32x128xf32>
    %273 = vector.broadcast %58 : f32 to vector<32x128xf32>
    %274 = arith.mulf %273, %263 : vector<32x128xf32>
    %275 = arith.addf %254, %274 : vector<32x128xf32>
    %276 = vector.broadcast %68 : f32 to vector<32x128xf32>
    %277 = arith.mulf %276, %263 : vector<32x128xf32>
    %278 = arith.addf %257, %277 : vector<32x128xf32>
    %279 = vector.broadcast %9 : f32 to vector<32x128xf32>
    %280 = arith.mulf %279, %84 : vector<32x128xf32>
    %281 = vector.broadcast %19 : f32 to vector<32x128xf32>
    %282 = arith.addf %280, %281 : vector<32x128xf32>
    %cst_9 = arith.constant 0.000000e+00 : f32
    %283 = vector.broadcast %cst_9 : f32 to vector<32x128xf32>
    %284 = arith.maximumf %282, %283 : vector<32x128xf32>
    %285 = vector.broadcast %29 : f32 to vector<32x128xf32>
    %286 = arith.mulf %285, %284 : vector<32x128xf32>
    %287 = arith.addf %266, %286 : vector<32x128xf32>
    %288 = vector.broadcast %39 : f32 to vector<32x128xf32>
    %289 = arith.mulf %288, %284 : vector<32x128xf32>
    %290 = arith.addf %269, %289 : vector<32x128xf32>
    %291 = vector.broadcast %49 : f32 to vector<32x128xf32>
    %292 = arith.mulf %291, %284 : vector<32x128xf32>
    %293 = arith.addf %272, %292 : vector<32x128xf32>
    %294 = vector.broadcast %59 : f32 to vector<32x128xf32>
    %295 = arith.mulf %294, %284 : vector<32x128xf32>
    %296 = arith.addf %275, %295 : vector<32x128xf32>
    %297 = vector.broadcast %69 : f32 to vector<32x128xf32>
    %298 = arith.mulf %297, %284 : vector<32x128xf32>
    %299 = arith.addf %278, %298 : vector<32x128xf32>
    %cst_10 = arith.constant 0.000000e+00 : f32
    %300 = vector.broadcast %cst_10 : f32 to vector<32x128xf32>
    %301 = arith.maximumf %287, %300 : vector<32x128xf32>
    %302 = vector.broadcast %75 : f32 to vector<32x128xf32>
    %303 = arith.mulf %302, %301 : vector<32x128xf32>
    %304 = vector.broadcast %80 : f32 to vector<32x128xf32>
    %305 = arith.addf %303, %304 : vector<32x128xf32>
    %cst_11 = arith.constant 0.000000e+00 : f32
    %306 = vector.broadcast %cst_11 : f32 to vector<32x128xf32>
    %307 = arith.maximumf %290, %306 : vector<32x128xf32>
    %308 = vector.broadcast %76 : f32 to vector<32x128xf32>
    %309 = arith.mulf %308, %307 : vector<32x128xf32>
    %310 = arith.addf %305, %309 : vector<32x128xf32>
    %cst_12 = arith.constant 0.000000e+00 : f32
    %311 = vector.broadcast %cst_12 : f32 to vector<32x128xf32>
    %312 = arith.maximumf %293, %311 : vector<32x128xf32>
    %313 = vector.broadcast %77 : f32 to vector<32x128xf32>
    %314 = arith.mulf %313, %312 : vector<32x128xf32>
    %315 = arith.addf %310, %314 : vector<32x128xf32>
    %cst_13 = arith.constant 0.000000e+00 : f32
    %316 = vector.broadcast %cst_13 : f32 to vector<32x128xf32>
    %317 = arith.maximumf %296, %316 : vector<32x128xf32>
    %318 = vector.broadcast %78 : f32 to vector<32x128xf32>
    %319 = arith.mulf %318, %317 : vector<32x128xf32>
    %320 = arith.addf %315, %319 : vector<32x128xf32>
    %cst_14 = arith.constant 0.000000e+00 : f32
    %321 = vector.broadcast %cst_14 : f32 to vector<32x128xf32>
    %322 = arith.maximumf %299, %321 : vector<32x128xf32>
    %323 = vector.broadcast %79 : f32 to vector<32x128xf32>
    %324 = arith.mulf %323, %322 : vector<32x128xf32>
    %325 = arith.addf %320, %324 : vector<32x128xf32>
    %326 = arith.index_cast %82 : i32 to index
    %c0_15 = arith.constant 0 : index
    %327 = vector.load %arg3[%326, %c0_15] : memref<32x128xf32, #tpu.memory_space<vmem>>, vector<32x128xf32>
    tpu.vector_store %arg3[%326, %c0_15], %325 {strides = array<i32>} : memref<32x128xf32, #tpu.memory_space<vmem>>, vector<32x128xf32>,
    %c1_i32 = arith.constant 1 : i32
    return
  }
  func.func @transform_0(%arg0: i32) -> i32 {
    %c0_i32 = arith.constant 0 : i32
    %c0_i32_0 = arith.constant 0 : i32
    return %c0_i32 : i32
  }
  func.func @transform_1(%arg0: i32) -> (i32, i32) {
    %c0_i32 = arith.constant 0 : i32
    %c0_i32_0 = arith.constant 0 : i32
    return %arg0, %c0_i32 : i32, i32
  }
  func.func @transform_2(%arg0: i32) -> (i32, i32) {
    %c0_i32 = arith.constant 0 : i32
    %c0_i32_0 = arith.constant 0 : i32
    return %arg0, %c0_i32 : i32, i32
  }
}

</mosaic_0001>

<llo_original>
// kernel: tpu_custom_call.1
$region0: #{tpu_custom_call.1}
  #allocation0 [shape = 'u32[]', space=smem, size = 0x4, offset = 0x4, fixed_abs, tag = 'smem constant byte address 0x4 - core index']
  #allocation1 [shape = 'u32[144,128]{1,0:T(1,128)}', space=vmem, size = 0x12000, scoped, tag = 'internal scratch']
  %s0 = inlined_call_operand.hbm [shape: f32[81], index: 0, kind: input, shape index: {}]
  %s1 = inlined_call_operand.hbm [shape: f32[32,128], index: 1, kind: input, shape index: {}]
  %s2 = inlined_call_operand.hbm [shape: f32[32,128], index: 2, kind: output, shape index: {}]
  %s3 = sld [smem:[#allocation0]]
  $region26: #{tpu_custom_call.1} parent=0
    _
  %s5 = ssub.s32 1, %s3
  %s6 = scalar_select 0, %s5, %s3
  $region1: #{tpu_custom_call.1} parent=0
    #allocation2 [shape = 'u8[512]{0}', space=smem, size = 0x200, scoped, tag = 'input window, operand 0, single buffered']
    #allocation3 [shape = 's32[1]{0}', space=sflag, size = 0x4, scoped, tag = 'scoped memory for tpu_custom_call.1']
    #allocation4 [shape = 's32[1]{0}', space=sflag, size = 0x4, scoped, tag = 'scoped memory for tpu_custom_call.1']
    #allocation5 [shape = 's32[1]{0}', space=sflag, size = 0x4, scoped, tag = 'scoped memory for tpu_custom_call.1']
    #allocation6 [shape = 'u8[16384]{0}', space=vmem, size = 0x4000, scoped, tag = 'input window, operand 1, single buffered']
    #allocation7 [shape = 'u8[16384]{0}', space=vmem, size = 0x4000, scoped, tag = 'output window, operand 0, single buffered']
    %7 = vsyncpa [#allocation5], 0
    %8 = vsyncpa [#allocation3], 0
    %9 = vsyncpa [#allocation4], 0
    // Predicated region
    $region2: #{tpu_custom_call.1} parent=1 // pred_check
      _
    $region3: #{tpu_custom_call.1} parent=1 // pred_check_branch
      %11 = sbr.rel (0) target = $region5
    $region4: #{tpu_custom_call.1} parent=1 // pred_region
      %s13 = ssub.s32 16, 16
      %14 = vsyncadd [#allocation5], %s13
      %17 = dma.hbm_to_smem %s0, 16, [#allocation2], [#allocation5]
    $region5: #{tpu_custom_call.1} parent=1 // pred_fallthru
      _
    // Predicated region
    $region6: #{tpu_custom_call.1} parent=1 // pred_check
      _
    $region7: #{tpu_custom_call.1} parent=1 // pred_check_branch
      %19 = sbr.rel (0) target = $region9
    $region8: #{tpu_custom_call.1} parent=1 // pred_region
      %s21 = ssub.s32 512, 512
      %22 = vsyncadd [#allocation3], %s21
      %s23 = sshll.u32 [#allocation6], 4
      %s24 = int_to_ptr.vmem [resolvable:$true] %s23
      %29 = dma.hbm_to_vmem [thread:$0]  %s1, 512, %s24, [#allocation3], 128, 128, 8
    $region9: #{tpu_custom_call.1} parent=1 // pred_fallthru
      _
    // Predicated region
    $region10: #{tpu_custom_call.1} parent=1 // pred_check
      _
    $region11: #{tpu_custom_call.1} parent=1 // pred_check_branch
      %31 = sbr.rel (0) target = $region13
    $region12: #{tpu_custom_call.1} parent=1 // pred_region
      %32 = dma.done [#allocation5], 16
    $region13: #{tpu_custom_call.1} parent=1 // pred_fallthru
      _
    // Predicated region
    $region14: #{tpu_custom_call.1} parent=1 // pred_check
      _
    $region15: #{tpu_custom_call.1} parent=1 // pred_check_branch
      %34 = sbr.rel (0) target = $region17
    $region16: #{tpu_custom_call.1} parent=1 // pred_region
      %35 = dma.done [#allocation3], 512
    $region17: #{tpu_custom_call.1} parent=1 // pred_fallthru
      _
    %36 = sfence
    %s37 = sld [smem:[#allocation2]]
    %s38 = sld [smem:[#allocation2 + $0x1]]
    %s39 = sld [smem:[#allocation2 + $0x2]]
    %s40 = sld [smem:[#allocation2 + $0x3]]
    %s41 = sld [smem:[#allocation2 + $0x4]]
    %s42 = sld [smem:[#allocation2 + $0x5]]
    %s43 = sld [smem:[#allocation2 + $0x6]]
    %s44 = sld [smem:[#allocation2 + $0x7]]
    %s45 = sld [smem:[#allocation2 + $0x8]]
    %s46 = sld [smem:[#allocation2 + $0x9]]
    %s47 = sld [smem:[#allocation2 + $0xa]]
    %s48 = sld [smem:[#allocation2 + $0xb]]
    %s49 = sld [smem:[#allocation2 + $0xc]]
    %s50 = sld [smem:[#allocation2 + $0xd]]
    %s51 = sld [smem:[#allocation2 + $0xe]]
    %s52 = sld [smem:[#allocation2 + $0xf]]
    %s53 = sld [smem:[#allocation2 + $0x10]]
    %s54 = sld [smem:[#allocation2 + $0x11]]
    %s55 = sld [smem:[#allocation2 + $0x12]]
    %s56 = sld [smem:[#allocation2 + $0x13]]
    %s57 = sld [smem:[#allocation2 + $0x14]]
    %s58 = sld [smem:[#allocation2 + $0x15]]
    %s59 = sld [smem:[#allocation2 + $0x16]]
    %s60 = sld [smem:[#allocation2 + $0x17]]
    %s61 = sld [smem:[#allocation2 + $0x18]]
    %s62 = sld [smem:[#allocation2 + $0x19]]
    %s63 = sld [smem:[#allocation2 + $0x1a]]
    %s64 = sld [smem:[#allocation2 + $0x1b]]
    %s65 = sld [smem:[#allocation2 + $0x1c]]
    %s66 = sld [smem:[#allocation2 + $0x1d]]
    %s67 = sld [smem:[#allocation2 + $0x1e]]
    %s68 = sld [smem:[#allocation2 + $0x1f]]
    %s69 = sld [smem:[#allocation2 + $0x20]]
    %s70 = sld [smem:[#allocation2 + $0x21]]
    %s71 = sld [smem:[#allocation2 + $0x22]]
    %s72 = sld [smem:[#allocation2 + $0x23]]
    %s73 = sld [smem:[#allocation2 + $0x24]]
    %s74 = sld [smem:[#allocation2 + $0x25]]
    %s75 = sld [smem:[#allocation2 + $0x26]]
    %s76 = sld [smem:[#allocation2 + $0x27]]
    %s77 = sld [smem:[#allocation2 + $0x28]]
    %s78 = sld [smem:[#allocation2 + $0x29]]
    %s79 = sld [smem:[#allocation2 + $0x2a]]
    %s80 = sld [smem:[#allocation2 + $0x2b]]
    %s81 = sld [smem:[#allocation2 + $0x2c]]
    %s82 = sld [smem:[#allocation2 + $0x2d]]
    %s83 = sld [smem:[#allocation2 + $0x2e]]
    %s84 = sld [smem:[#allocation2 + $0x2f]]
    %s85 = sld [smem:[#allocation2 + $0x30]]
    %s86 = sld [smem:[#allocation2 + $0x31]]
    %s87 = sld [smem:[#allocation2 + $0x32]]
    %s88 = sld [smem:[#allocation2 + $0x33]]
    %s89 = sld [smem:[#allocation2 + $0x34]]
    %s90 = sld [smem:[#allocation2 + $0x35]]
    %s91 = sld [smem:[#allocation2 + $0x36]]
    %s92 = sld [smem:[#allocation2 + $0x37]]
    %s93 = sld [smem:[#allocation2 + $0x38]]
    %s94 = sld [smem:[#allocation2 + $0x39]]
    %s95 = sld [smem:[#allocation2 + $0x3a]]
    %s96 = sld [smem:[#allocation2 + $0x3b]]
    %s97 = sld [smem:[#allocation2 + $0x3c]]
    %s98 = sld [smem:[#allocation2 + $0x3d]]
    %s99 = sld [smem:[#allocation2 + $0x3e]]
    %s100 = sld [smem:[#allocation2 + $0x3f]]
    %s101 = sld [smem:[#allocation2 + $0x40]]
    %s102 = sld [smem:[#allocation2 + $0x41]]
    %s103 = sld [smem:[#allocation2 + $0x42]]
    %s104 = sld [smem:[#allocation2 + $0x43]]
    %s105 = sld [smem:[#allocation2 + $0x44]]
    %s106 = sld [smem:[#allocation2 + $0x45]]
    %s107 = sld [smem:[#allocation2 + $0x46]]
    %s108 = sld [smem:[#allocation2 + $0x47]]
    %s109 = sld [smem:[#allocation2 + $0x48]]
    %s110 = sld [smem:[#allocation2 + $0x49]]
    %s111 = sld [smem:[#allocation2 + $0x4a]]
    %s112 = sld [smem:[#allocation2 + $0x4b]]
    %s113 = sld [smem:[#allocation2 + $0x4c]]
    %s114 = sld [smem:[#allocation2 + $0x4d]]
    %s115 = sld [smem:[#allocation2 + $0x4e]]
    %s116 = sld [smem:[#allocation2 + $0x4f]]
    %s117 = sld [smem:[#allocation2 + $0x50]]
    %v118 = vld [vmem:[#allocation6] sm:$0xff]
    %v119 = vld [vmem:[#allocation6 + $0x8] sm:$0xff]
    %v120 = vld [vmem:[#allocation6 + $0x10] sm:$0xff]
    %v121 = vld [vmem:[#allocation6 + $0x18] sm:$0xff]
    %v122 = vstv %s37
    %v123 = vmul.f32 %v122, %v118
    %v124 = vmul.f32 %v122, %v119
    %v125 = vmul.f32 %v122, %v120
    %v126 = vmul.f32 %v122, %v121
    %v127 = vstv %s47
    %v128 = vadd.f32 %v123, %v127
    %v129 = vadd.f32 %v124, %v127
    %v130 = vadd.f32 %v125, %v127
    %v131 = vadd.f32 %v126, %v127
    %v132 = vmax.f32 %v128, 0.0
    %v133 = vmax.f32 %v129, 0.0
    %v134 = vmax.f32 %v130, 0.0
    %v135 = vmax.f32 %v131, 0.0
    %v136 = vstv %s57
    %v137 = vmul.f32 %v136, %v132
    %v138 = vmul.f32 %v136, %v133
    %v139 = vmul.f32 %v136, %v134
    %v140 = vmul.f32 %v136, %v135
    %v141 = vstv %s107
    %v142 = vadd.f32 %v137, %v141
    %v143 = vadd.f32 %v138, %v141
    %v144 = vadd.f32 %v139, %v141
    %v145 = vadd.f32 %v140, %v141
    %v146 = vstv %s67
    %v147 = vmul.f32 %v146, %v132
    %v148 = vmul.f32 %v146, %v133
    %v149 = vmul.f32 %v146, %v134
    %v150 = vmul.f32 %v146, %v135
    %v151 = vstv %s108
    %v152 = vadd.f32 %v147, %v151
    %v153 = vadd.f32 %v148, %v151
    %v154 = vadd.f32 %v149, %v151
    %v155 = vadd.f32 %v150, %v151
    %v156 = vstv %s77
    %v157 = vmul.f32 %v156, %v132
    %v158 = vmul.f32 %v156, %v133
    %v159 = vmul.f32 %v156, %v134
    %v160 = vmul.f32 %v156, %v135
    %v161 = vstv %s109
    %v162 = vadd.f32 %v157, %v161
    %v163 = vadd.f32 %v158, %v161
    %v164 = vadd.f32 %v159, %v161
    %v165 = vadd.f32 %v160, %v161
    %v166 = vstv %s87
    %v167 = vmul.f32 %v166, %v132
    %v168 = vmul.f32 %v166, %v133
    %v169 = vmul.f32 %v166, %v134
    %v170 = vmul.f32 %v166, %v135
    %v171 = vstv %s110
    %v172 = vadd.f32 %v167, %v171
    %v173 = vadd.f32 %v168, %v171
    %v174 = vadd.f32 %v169, %v171
    %v175 = vadd.f32 %v170, %v171
    %v176 = vstv %s97
    %v177 = vmul.f32 %v176, %v132
    %v178 = vmul.f32 %v176, %v133
    %v179 = vmul.f32 %v176, %v134
    %v180 = vmul.f32 %v176, %v135
    %v181 = vstv %s111
    %v182 = vadd.f32 %v177, %v181
    %v183 = vadd.f32 %v178, %v181
    %v184 = vadd.f32 %v179, %v181
    %v185 = vadd.f32 %v180, %v181
    %v186 = vstv %s38
    %v187 = vmul.f32 %v186, %v118
    %v188 = vmul.f32 %v186, %v119
    %v189 = vmul.f32 %v186, %v120
    %v190 = vmul.f32 %v186, %v121
    %v191 = vstv %s48
    %v192 = vadd.f32 %v187, %v191
    %v193 = vadd.f32 %v188, %v191
    %v194 = vadd.f32 %v189, %v191
    %v195 = vadd.f32 %v190, %v191
    %v196 = vmax.f32 %v192, 0.0
    %v197 = vmax.f32 %v193, 0.0
    %v198 = vmax.f32 %v194, 0.0
    %v199 = vmax.f32 %v195, 0.0
    %v200 = vstv %s58
    %v201 = vmul.f32 %v200, %v196
    %v202 = vmul.f32 %v200, %v197
    %v203 = vmul.f32 %v200, %v198
    %v204 = vmul.f32 %v200, %v199
    %v205 = vadd.f32 %v142, %v201
    %v206 = vadd.f32 %v143, %v202
    %v207 = vadd.f32 %v144, %v203
    %v208 = vadd.f32 %v145, %v204
    %v209 = vstv %s68
    %v210 = vmul.f32 %v209, %v196
    %v211 = vmul.f32 %v209, %v197
    %v212 = vmul.f32 %v209, %v198
    %v213 = vmul.f32 %v209, %v199
    %v214 = vadd.f32 %v152, %v210
    %v215 = vadd.f32 %v153, %v211
    %v216 = vadd.f32 %v154, %v212
    %v217 = vadd.f32 %v155, %v213
    %v218 = vstv %s78
    %v219 = vmul.f32 %v218, %v196
    %v220 = vmul.f32 %v218, %v197
    %v221 = vmul.f32 %v218, %v198
    %v222 = vmul.f32 %v218, %v199
    %v223 = vadd.f32 %v162, %v219
    %v224 = vadd.f32 %v163, %v220
    %v225 = vadd.f32 %v164, %v221
    %v226 = vadd.f32 %v165, %v222
    %v227 = vstv %s88
    %v228 = vmul.f32 %v227, %v196
    %v229 = vmul.f32 %v227, %v197
    %v230 = vmul.f32 %v227, %v198
    %v231 = vmul.f32 %v227, %v199
    %v232 = vadd.f32 %v172, %v228
    %v233 = vadd.f32 %v173, %v229
    %v234 = vadd.f32 %v174, %v230
    %v235 = vadd.f32 %v175, %v231
    %v236 = vstv %s98
    %v237 = vmul.f32 %v236, %v196
    %v238 = vmul.f32 %v236, %v197
    %v239 = vmul.f32 %v236, %v198
    %v240 = vmul.f32 %v236, %v199
    %v241 = vadd.f32 %v182, %v237
    %v242 = vadd.f32 %v183, %v238
    %v243 = vadd.f32 %v184, %v239
    %v244 = vadd.f32 %v185, %v240
    %v245 = vstv %s39
    %v246 = vmul.f32 %v245, %v118
    %v247 = vmul.f32 %v245, %v119
    %v248 = vmul.f32 %v245, %v120
    %v249 = vmul.f32 %v245, %v121
    %v250 = vstv %s49
    %v251 = vadd.f32 %v246, %v250
    %v252 = vadd.f32 %v247, %v250
    %v253 = vadd.f32 %v248, %v250
    %v254 = vadd.f32 %v249, %v250
    %v255 = vmax.f32 %v251, 0.0
    %v256 = vmax.f32 %v252, 0.0
    %v257 = vmax.f32 %v253, 0.0
    %v258 = vmax.f32 %v254, 0.0
    %v259 = vstv %s59
    %v260 = vmul.f32 %v259, %v255
    %v261 = vmul.f32 %v259, %v256
    %v262 = vmul.f32 %v259, %v257
    %v263 = vmul.f32 %v259, %v258
    %v264 = vadd.f32 %v205, %v260
    %v265 = vadd.f32 %v206, %v261
    %v266 = vadd.f32 %v207, %v262
    %v267 = vadd.f32 %v208, %v263
    %v268 = vstv %s69
    %v269 = vmul.f32 %v268, %v255
    %v270 = vmul.f32 %v268, %v256
    %v271 = vmul.f32 %v268, %v257
    %v272 = vmul.f32 %v268, %v258
    %v273 = vadd.f32 %v214, %v269
    %v274 = vadd.f32 %v215, %v270
    %v275 = vadd.f32 %v216, %v271
    %v276 = vadd.f32 %v217, %v272
    %v277 = vstv %s79
    %v278 = vmul.f32 %v277, %v255
    %v279 = vmul.f32 %v277, %v256
    %v280 = vmul.f32 %v277, %v257
    %v281 = vmul.f32 %v277, %v258
    %v282 = vadd.f32 %v223, %v278
    %v283 = vadd.f32 %v224, %v279
    %v284 = vadd.f32 %v225, %v280
    %v285 = vadd.f32 %v226, %v281
    %v286 = vstv %s89
    %v287 = vmul.f32 %v286, %v255
    %v288 = vmul.f32 %v286, %v256
    %v289 = vmul.f32 %v286, %v257
    %v290 = vmul.f32 %v286, %v258
    %v291 = vadd.f32 %v232, %v287
    %v292 = vadd.f32 %v233, %v288
    %v293 = vadd.f32 %v234, %v289
    %v294 = vadd.f32 %v235, %v290
    %v295 = vstv %s99
    %v296 = vmul.f32 %v295, %v255
    %v297 = vmul.f32 %v295, %v256
    %v298 = vmul.f32 %v295, %v257
    %v299 = vmul.f32 %v295, %v258
    %v300 = vadd.f32 %v241, %v296
    %v301 = vadd.f32 %v242, %v297
    %v302 = vadd.f32 %v243, %v298
    %v303 = vadd.f32 %v244, %v299
    %v304 = vstv %s40
    %v305 = vmul.f32 %v304, %v118
    %v306 = vmul.f32 %v304, %v119
    %v307 = vmul.f32 %v304, %v120
    %v308 = vmul.f32 %v304, %v121
    %v309 = vstv %s50
    %v310 = vadd.f32 %v305, %v309
    %v311 = vadd.f32 %v306, %v309
    %v312 = vadd.f32 %v307, %v309
    %v313 = vadd.f32 %v308, %v309
    %v314 = vmax.f32 %v310, 0.0
    %v315 = vmax.f32 %v311, 0.0
    %v316 = vmax.f32 %v312, 0.0
    %v317 = vmax.f32 %v313, 0.0
    %v318 = vstv %s60
    %v319 = vmul.f32 %v318, %v314
    %v320 = vmul.f32 %v318, %v315
    %v321 = vmul.f32 %v318, %v316
    %v322 = vmul.f32 %v318, %v317
    %v323 = vadd.f32 %v264, %v319
    %v324 = vadd.f32 %v265, %v320
    %v325 = vadd.f32 %v266, %v321
    %v326 = vadd.f32 %v267, %v322
    %v327 = vstv %s70
    %v328 = vmul.f32 %v327, %v314
    %v329 = vmul.f32 %v327, %v315
    %v330 = vmul.f32 %v327, %v316
    %v331 = vmul.f32 %v327, %v317
    %v332 = vadd.f32 %v273, %v328
    %v333 = vadd.f32 %v274, %v329
    %v334 = vadd.f32 %v275, %v330
    %v335 = vadd.f32 %v276, %v331
    %v336 = vstv %s80
    %v337 = vmul.f32 %v336, %v314
    %v338 = vmul.f32 %v336, %v315
    %v339 = vmul.f32 %v336, %v316
    %v340 = vmul.f32 %v336, %v317
    %v341 = vadd.f32 %v282, %v337
    %v342 = vadd.f32 %v283, %v338
    %v343 = vadd.f32 %v284, %v339
    %v344 = vadd.f32 %v285, %v340
    %v345 = vstv %s90
    %v346 = vmul.f32 %v345, %v314
    %v347 = vmul.f32 %v345, %v315
    %v348 = vmul.f32 %v345, %v316
    %v349 = vmul.f32 %v345, %v317
    %v350 = vadd.f32 %v291, %v346
    %v351 = vadd.f32 %v292, %v347
    %v352 = vadd.f32 %v293, %v348
    %v353 = vadd.f32 %v294, %v349
    %v354 = vstv %s100
    %v355 = vmul.f32 %v354, %v314
    %v356 = vmul.f32 %v354, %v315
    %v357 = vmul.f32 %v354, %v316
    %v358 = vmul.f32 %v354, %v317
    %v359 = vadd.f32 %v300, %v355
    %v360 = vadd.f32 %v301, %v356
    %v361 = vadd.f32 %v302, %v357
    %v362 = vadd.f32 %v303, %v358
    %v363 = vstv %s41
    %v364 = vmul.f32 %v363, %v118
    %v365 = vmul.f32 %v363, %v119
    %v366 = vmul.f32 %v363, %v120
    %v367 = vmul.f32 %v363, %v121
    %v368 = vstv %s51
    %v369 = vadd.f32 %v364, %v368
    %v370 = vadd.f32 %v365, %v368
    %v371 = vadd.f32 %v366, %v368
    %v372 = vadd.f32 %v367, %v368
    %v373 = vmax.f32 %v369, 0.0
    %v374 = vmax.f32 %v370, 0.0
    %v375 = vmax.f32 %v371, 0.0
    %v376 = vmax.f32 %v372, 0.0
    %v377 = vstv %s61
    %v378 = vmul.f32 %v377, %v373
    %v379 = vmul.f32 %v377, %v374
    %v380 = vmul.f32 %v377, %v375
    %v381 = vmul.f32 %v377, %v376
    %v382 = vadd.f32 %v323, %v378
    %v383 = vadd.f32 %v324, %v379
    %v384 = vadd.f32 %v325, %v380
    %v385 = vadd.f32 %v326, %v381
    %v386 = vstv %s71
    %v387 = vmul.f32 %v386, %v373
    %v388 = vmul.f32 %v386, %v374
    %v389 = vmul.f32 %v386, %v375
    %v390 = vmul.f32 %v386, %v376
    %v391 = vadd.f32 %v332, %v387
    %v392 = vadd.f32 %v333, %v388
    %v393 = vadd.f32 %v334, %v389
    %v394 = vadd.f32 %v335, %v390
    %v395 = vstv %s81
    %v396 = vmul.f32 %v395, %v373
    %v397 = vmul.f32 %v395, %v374
    %v398 = vmul.f32 %v395, %v375
    %v399 = vmul.f32 %v395, %v376
    %v400 = vadd.f32 %v341, %v396
    %v401 = vadd.f32 %v342, %v397
    %v402 = vadd.f32 %v343, %v398
    %v403 = vadd.f32 %v344, %v399
    %v404 = vstv %s91
    %v405 = vmul.f32 %v404, %v373
    %v406 = vmul.f32 %v404, %v374
    %v407 = vmul.f32 %v404, %v375
    %v408 = vmul.f32 %v404, %v376
    %v409 = vadd.f32 %v350, %v405
    %v410 = vadd.f32 %v351, %v406
    %v411 = vadd.f32 %v352, %v407
    %v412 = vadd.f32 %v353, %v408
    %v413 = vstv %s101
    %v414 = vmul.f32 %v413, %v373
    %v415 = vmul.f32 %v413, %v374
    %v416 = vmul.f32 %v413, %v375
    %v417 = vmul.f32 %v413, %v376
    %v418 = vadd.f32 %v359, %v414
    %v419 = vadd.f32 %v360, %v415
    %v420 = vadd.f32 %v361, %v416
    %v421 = vadd.f32 %v362, %v417
    %v422 = vstv %s42
    %v423 = vmul.f32 %v422, %v118
    %v424 = vmul.f32 %v422, %v119
    %v425 = vmul.f32 %v422, %v120
    %v426 = vmul.f32 %v422, %v121
    %v427 = vstv %s52
    %v428 = vadd.f32 %v423, %v427
    %v429 = vadd.f32 %v424, %v427
    %v430 = vadd.f32 %v425, %v427
    %v431 = vadd.f32 %v426, %v427
    %v432 = vmax.f32 %v428, 0.0
    %v433 = vmax.f32 %v429, 0.0
    %v434 = vmax.f32 %v430, 0.0
    %v435 = vmax.f32 %v431, 0.0
    %v436 = vstv %s62
    %v437 = vmul.f32 %v436, %v432
    %v438 = vmul.f32 %v436, %v433
    %v439 = vmul.f32 %v436, %v434
    %v440 = vmul.f32 %v436, %v435
    %v441 = vadd.f32 %v382, %v437
    %v442 = vadd.f32 %v383, %v438
    %v443 = vadd.f32 %v384, %v439
    %v444 = vadd.f32 %v385, %v440
    %v445 = vstv %s72
    %v446 = vmul.f32 %v445, %v432
    %v447 = vmul.f32 %v445, %v433
    %v448 = vmul.f32 %v445, %v434
    %v449 = vmul.f32 %v445, %v435
    %v450 = vadd.f32 %v391, %v446
    %v451 = vadd.f32 %v392, %v447
    %v452 = vadd.f32 %v393, %v448
    %v453 = vadd.f32 %v394, %v449
    %v454 = vstv %s82
    %v455 = vmul.f32 %v454, %v432
    %v456 = vmul.f32 %v454, %v433
    %v457 = vmul.f32 %v454, %v434
    %v458 = vmul.f32 %v454, %v435
    %v459 = vadd.f32 %v400, %v455
    %v460 = vadd.f32 %v401, %v456
    %v461 = vadd.f32 %v402, %v457
    %v462 = vadd.f32 %v403, %v458
    %v463 = vstv %s92
    %v464 = vmul.f32 %v463, %v432
    %v465 = vmul.f32 %v463, %v433
    %v466 = vmul.f32 %v463, %v434
    %v467 = vmul.f32 %v463, %v435
    %v468 = vadd.f32 %v409, %v464
    %v469 = vadd.f32 %v410, %v465
    %v470 = vadd.f32 %v411, %v466
    %v471 = vadd.f32 %v412, %v467
    %v472 = vstv %s102
    %v473 = vmul.f32 %v472, %v432
    %v474 = vmul.f32 %v472, %v433
    %v475 = vmul.f32 %v472, %v434
    %v476 = vmul.f32 %v472, %v435
    %v477 = vadd.f32 %v418, %v473
    %v478 = vadd.f32 %v419, %v474
    %v479 = vadd.f32 %v420, %v475
    %v480 = vadd.f32 %v421, %v476
    %v481 = vstv %s43
    %v482 = vmul.f32 %v481, %v118
    %v483 = vmul.f32 %v481, %v119
    %v484 = vmul.f32 %v481, %v120
    %v485 = vmul.f32 %v481, %v121
    %v486 = vstv %s53
    %v487 = vadd.f32 %v482, %v486
    %v488 = vadd.f32 %v483, %v486
    %v489 = vadd.f32 %v484, %v486
    %v490 = vadd.f32 %v485, %v486
    %v491 = vmax.f32 %v487, 0.0
    %v492 = vmax.f32 %v488, 0.0
    %v493 = vmax.f32 %v489, 0.0
    %v494 = vmax.f32 %v490, 0.0
    %v495 = vstv %s63
    %v496 = vmul.f32 %v495, %v491
    %v497 = vmul.f32 %v495, %v492
    %v498 = vmul.f32 %v495, %v493
    %v499 = vmul.f32 %v495, %v494
    %v500 = vadd.f32 %v441, %v496
    %v501 = vadd.f32 %v442, %v497
    %v502 = vadd.f32 %v443, %v498
    %v503 = vadd.f32 %v444, %v499
    %v504 = vstv %s73
    %v505 = vmul.f32 %v504, %v491
    %v506 = vmul.f32 %v504, %v492
    %v507 = vmul.f32 %v504, %v493
    %v508 = vmul.f32 %v504, %v494
    %v509 = vadd.f32 %v450, %v505
    %v510 = vadd.f32 %v451, %v506
    %v511 = vadd.f32 %v452, %v507
    %v512 = vadd.f32 %v453, %v508
    %v513 = vstv %s83
    %v514 = vmul.f32 %v513, %v491
    %v515 = vmul.f32 %v513, %v492
    %v516 = vmul.f32 %v513, %v493
    %v517 = vmul.f32 %v513, %v494
    %v518 = vadd.f32 %v459, %v514
    %v519 = vadd.f32 %v460, %v515
    %v520 = vadd.f32 %v461, %v516
    %v521 = vadd.f32 %v462, %v517
    %v522 = vstv %s93
    %v523 = vmul.f32 %v522, %v491
    %v524 = vmul.f32 %v522, %v492
    %v525 = vmul.f32 %v522, %v493
    %v526 = vmul.f32 %v522, %v494
    %v527 = vadd.f32 %v468, %v523
    %v528 = vadd.f32 %v469, %v524
    %v529 = vadd.f32 %v470, %v525
    %v530 = vadd.f32 %v471, %v526
    %v531 = vstv %s103
    %v532 = vmul.f32 %v531, %v491
    %v533 = vmul.f32 %v531, %v492
    %v534 = vmul.f32 %v531, %v493
    %v535 = vmul.f32 %v531, %v494
    %v536 = vadd.f32 %v477, %v532
    %v537 = vadd.f32 %v478, %v533
    %v538 = vadd.f32 %v479, %v534
    %v539 = vadd.f32 %v480, %v535
    %v540 = vstv %s44
    %v541 = vmul.f32 %v540, %v118
    %v542 = vmul.f32 %v540, %v119
    %v543 = vmul.f32 %v540, %v120
    %v544 = vmul.f32 %v540, %v121
    %v545 = vstv %s54
    %v546 = vadd.f32 %v541, %v545
    %v547 = vadd.f32 %v542, %v545
    %v548 = vadd.f32 %v543, %v545
    %v549 = vadd.f32 %v544, %v545
    %v550 = vmax.f32 %v546, 0.0
    %v551 = vmax.f32 %v547, 0.0
    %v552 = vmax.f32 %v548, 0.0
    %v553 = vmax.f32 %v549, 0.0
    %v554 = vstv %s64
    %v555 = vmul.f32 %v554, %v550
    %v556 = vmul.f32 %v554, %v551
    %v557 = vmul.f32 %v554, %v552
    %v558 = vmul.f32 %v554, %v553
    %v559 = vadd.f32 %v500, %v555
    %v560 = vadd.f32 %v501, %v556
    %v561 = vadd.f32 %v502, %v557
    %v562 = vadd.f32 %v503, %v558
    %v563 = vstv %s74
    %v564 = vmul.f32 %v563, %v550
    %v565 = vmul.f32 %v563, %v551
    %v566 = vmul.f32 %v563, %v552
    %v567 = vmul.f32 %v563, %v553
    %v568 = vadd.f32 %v509, %v564
    %v569 = vadd.f32 %v510, %v565
    %v570 = vadd.f32 %v511, %v566
    %v571 = vadd.f32 %v512, %v567
    %v572 = vstv %s84
    %v573 = vmul.f32 %v572, %v550
    %v574 = vmul.f32 %v572, %v551
    %v575 = vmul.f32 %v572, %v552
    %v576 = vmul.f32 %v572, %v553
    %v577 = vadd.f32 %v518, %v573
    %v578 = vadd.f32 %v519, %v574
    %v579 = vadd.f32 %v520, %v575
    %v580 = vadd.f32 %v521, %v576
    %v581 = vstv %s94
    %v582 = vmul.f32 %v581, %v550
    %v583 = vmul.f32 %v581, %v551
    %v584 = vmul.f32 %v581, %v552
    %v585 = vmul.f32 %v581, %v553
    %v586 = vadd.f32 %v527, %v582
    %v587 = vadd.f32 %v528, %v583
    %v588 = vadd.f32 %v529, %v584
    %v589 = vadd.f32 %v530, %v585
    %v590 = vstv %s104
    %v591 = vmul.f32 %v590, %v550
    %v592 = vmul.f32 %v590, %v551
    %v593 = vmul.f32 %v590, %v552
    %v594 = vmul.f32 %v590, %v553
    %v595 = vadd.f32 %v536, %v591
    %v596 = vadd.f32 %v537, %v592
    %v597 = vadd.f32 %v538, %v593
    %v598 = vadd.f32 %v539, %v594
    %v599 = vstv %s45
    %v600 = vmul.f32 %v599, %v118
    %v601 = vmul.f32 %v599, %v119
    %v602 = vmul.f32 %v599, %v120
    %v603 = vmul.f32 %v599, %v121
    %v604 = vstv %s55
    %v605 = vadd.f32 %v600, %v604
    %v606 = vadd.f32 %v601, %v604
    %v607 = vadd.f32 %v602, %v604
    %v608 = vadd.f32 %v603, %v604
    %v609 = vmax.f32 %v605, 0.0
    %v610 = vmax.f32 %v606, 0.0
    %v611 = vmax.f32 %v607, 0.0
    %v612 = vmax.f32 %v608, 0.0
    %v613 = vstv %s65
    %v614 = vmul.f32 %v613, %v609
    %v615 = vmul.f32 %v613, %v610
    %v616 = vmul.f32 %v613, %v611
    %v617 = vmul.f32 %v613, %v612
    %v618 = vadd.f32 %v559, %v614
    %v619 = vadd.f32 %v560, %v615
    %v620 = vadd.f32 %v561, %v616
    %v621 = vadd.f32 %v562, %v617
    %v622 = vstv %s75
    %v623 = vmul.f32 %v622, %v609
    %v624 = vmul.f32 %v622, %v610
    %v625 = vmul.f32 %v622, %v611
    %v626 = vmul.f32 %v622, %v612
    %v627 = vadd.f32 %v568, %v623
    %v628 = vadd.f32 %v569, %v624
    %v629 = vadd.f32 %v570, %v625
    %v630 = vadd.f32 %v571, %v626
    %v631 = vstv %s85
    %v632 = vmul.f32 %v631, %v609
    %v633 = vmul.f32 %v631, %v610
    %v634 = vmul.f32 %v631, %v611
    %v635 = vmul.f32 %v631, %v612
    %v636 = vadd.f32 %v577, %v632
    %v637 = vadd.f32 %v578, %v633
    %v638 = vadd.f32 %v579, %v634
    %v639 = vadd.f32 %v580, %v635
    %v640 = vstv %s95
    %v641 = vmul.f32 %v640, %v609
    %v642 = vmul.f32 %v640, %v610
    %v643 = vmul.f32 %v640, %v611
    %v644 = vmul.f32 %v640, %v612
    %v645 = vadd.f32 %v586, %v641
    %v646 = vadd.f32 %v587, %v642
    %v647 = vadd.f32 %v588, %v643
    %v648 = vadd.f32 %v589, %v644
    %v649 = vstv %s105
    %v650 = vmul.f32 %v649, %v609
    %v651 = vmul.f32 %v649, %v610
    %v652 = vmul.f32 %v649, %v611
    %v653 = vmul.f32 %v649, %v612
    %v654 = vadd.f32 %v595, %v650
    %v655 = vadd.f32 %v596, %v651
    %v656 = vadd.f32 %v597, %v652
    %v657 = vadd.f32 %v598, %v653
    %v658 = vstv %s46
    %v659 = vmul.f32 %v658, %v118
    %v660 = vmul.f32 %v658, %v119
    %v661 = vmul.f32 %v658, %v120
    %v662 = vmul.f32 %v658, %v121
    %v663 = vstv %s56
    %v664 = vadd.f32 %v659, %v663
    %v665 = vadd.f32 %v660, %v663
    %v666 = vadd.f32 %v661, %v663
    %v667 = vadd.f32 %v662, %v663
    %v668 = vmax.f32 %v664, 0.0
    %v669 = vmax.f32 %v665, 0.0
    %v670 = vmax.f32 %v666, 0.0
    %v671 = vmax.f32 %v667, 0.0
    %v672 = vstv %s66
    %v673 = vmul.f32 %v672, %v668
    %v674 = vmul.f32 %v672, %v669
    %v675 = vmul.f32 %v672, %v670
    %v676 = vmul.f32 %v672, %v671
    %v677 = vadd.f32 %v618, %v673
    %v678 = vadd.f32 %v619, %v674
    %v679 = vadd.f32 %v620, %v675
    %v680 = vadd.f32 %v621, %v676
    %v681 = vstv %s76
    %v682 = vmul.f32 %v681, %v668
    %v683 = vmul.f32 %v681, %v669
    %v684 = vmul.f32 %v681, %v670
    %v685 = vmul.f32 %v681, %v671
    %v686 = vadd.f32 %v627, %v682
    %v687 = vadd.f32 %v628, %v683
    %v688 = vadd.f32 %v629, %v684
    %v689 = vadd.f32 %v630, %v685
    %v690 = vstv %s86
    %v691 = vmul.f32 %v690, %v668
    %v692 = vmul.f32 %v690, %v669
    %v693 = vmul.f32 %v690, %v670
    %v694 = vmul.f32 %v690, %v671
    %v695 = vadd.f32 %v636, %v691
    %v696 = vadd.f32 %v637, %v692
    %v697 = vadd.f32 %v638, %v693
    %v698 = vadd.f32 %v639, %v694
    %v699 = vstv %s96
    %v700 = vmul.f32 %v699, %v668
    %v701 = vmul.f32 %v699, %v669
    %v702 = vmul.f32 %v699, %v670
    %v703 = vmul.f32 %v699, %v671
    %v704 = vadd.f32 %v645, %v700
    %v705 = vadd.f32 %v646, %v701
    %v706 = vadd.f32 %v647, %v702
    %v707 = vadd.f32 %v648, %v703
    %v708 = vstv %s106
    %v709 = vmul.f32 %v708, %v668
    %v710 = vmul.f32 %v708, %v669
    %v711 = vmul.f32 %v708, %v670
    %v712 = vmul.f32 %v708, %v671
    %v713 = vadd.f32 %v654, %v709
    %v714 = vadd.f32 %v655, %v710
    %v715 = vadd.f32 %v656, %v711
    %v716 = vadd.f32 %v657, %v712
    %v717 = vmax.f32 %v677, 0.0
    %v718 = vmax.f32 %v678, 0.0
    %v719 = vmax.f32 %v679, 0.0
    %v720 = vmax.f32 %v680, 0.0
    %v721 = vstv %s112
    %v722 = vmul.f32 %v721, %v717
    %v723 = vmul.f32 %v721, %v718
    %v724 = vmul.f32 %v721, %v719
    %v725 = vmul.f32 %v721, %v720
    %v726 = vstv %s117
    %v727 = vadd.f32 %v722, %v726
    %v728 = vadd.f32 %v723, %v726
    %v729 = vadd.f32 %v724, %v726
    %v730 = vadd.f32 %v725, %v726
    %v731 = vmax.f32 %v686, 0.0
    %v732 = vmax.f32 %v687, 0.0
    %v733 = vmax.f32 %v688, 0.0
    %v734 = vmax.f32 %v689, 0.0
    %v735 = vstv %s113
    %v736 = vmul.f32 %v735, %v731
    %v737 = vmul.f32 %v735, %v732
    %v738 = vmul.f32 %v735, %v733
    %v739 = vmul.f32 %v735, %v734
    %v740 = vadd.f32 %v727, %v736
    %v741 = vadd.f32 %v728, %v737
    %v742 = vadd.f32 %v729, %v738
    %v743 = vadd.f32 %v730, %v739
    %v744 = vmax.f32 %v695, 0.0
    %v745 = vmax.f32 %v696, 0.0
    %v746 = vmax.f32 %v697, 0.0
    %v747 = vmax.f32 %v698, 0.0
    %v748 = vstv %s114
    %v749 = vmul.f32 %v748, %v744
    %v750 = vmul.f32 %v748, %v745
    %v751 = vmul.f32 %v748, %v746
    %v752 = vmul.f32 %v748, %v747
    %v753 = vadd.f32 %v740, %v749
    %v754 = vadd.f32 %v741, %v750
    %v755 = vadd.f32 %v742, %v751
    %v756 = vadd.f32 %v743, %v752
    %v757 = vmax.f32 %v704, 0.0
    %v758 = vmax.f32 %v705, 0.0
    %v759 = vmax.f32 %v706, 0.0
    %v760 = vmax.f32 %v707, 0.0
    %v761 = vstv %s115
    %v762 = vmul.f32 %v761, %v757
    %v763 = vmul.f32 %v761, %v758
    %v764 = vmul.f32 %v761, %v759
    %v765 = vmul.f32 %v761, %v760
    %v766 = vadd.f32 %v753, %v762
    %v767 = vadd.f32 %v754, %v763
    %v768 = vadd.f32 %v755, %v764
    %v769 = vadd.f32 %v756, %v765
    %v770 = vmax.f32 %v713, 0.0
    %v771 = vmax.f32 %v714, 0.0
    %v772 = vmax.f32 %v715, 0.0
    %v773 = vmax.f32 %v716, 0.0
    %v774 = vstv %s116
    %v775 = vmul.f32 %v774, %v770
    %v776 = vmul.f32 %v774, %v771
    %v777 = vmul.f32 %v774, %v772
    %v778 = vmul.f32 %v774, %v773
    %v779 = vadd.f32 %v766, %v775
    %v780 = vadd.f32 %v767, %v776
    %v781 = vadd.f32 %v768, %v777
    %v782 = vadd.f32 %v769, %v778
    %783 = vst [vmem:[#allocation7] sm:$0xff] %v779
    %784 = vst [vmem:[#allocation7 + $0x8] sm:$0xff] %v780
    %785 = vst [vmem:[#allocation7 + $0x10] sm:$0xff] %v781
    %786 = vst [vmem:[#allocation7 + $0x18] sm:$0xff] %v782
    // Predicated region
    $region18: #{tpu_custom_call.1} parent=1 // pred_check
      _
    $region19: #{tpu_custom_call.1} parent=1 // pred_check_branch
      %788 = sbr.rel (0) target = $region21
    $region20: #{tpu_custom_call.1} parent=1 // pred_region
      %s790 = ssub.s32 512, 512
      %791 = vsyncadd [#allocation4], %s790
      %s792 = sshll.u32 [#allocation7], 4
      %s793 = int_to_ptr.vmem [resolvable:$true] %s792
      %798 = dma.vmem_to_hbm [thread:$0]  %s793, 512, %s2, [#allocation4], 128, 128, 8
    $region21: #{tpu_custom_call.1} parent=1 // pred_fallthru
      _
    // Predicated region
    $region22: #{tpu_custom_call.1} parent=1 // pred_check
      _
    $region23: #{tpu_custom_call.1} parent=1 // pred_check_branch
      %800 = sbr.rel (0) target = $region25
    $region24: #{tpu_custom_call.1} parent=1 // pred_region
      %801 = dma.done [#allocation4], 512
    $region25: #{tpu_custom_call.1} parent=1 // pred_fallthru
      _
    %802 = vsyncpa [#allocation3], 1
    %803 = vsyncpa [#allocation4], 1
    %804 = vsyncpa [#allocation5], 1

</llo_original>
